<compile_context>
chip_gen: v7x
topology: tpu7x:2x2x1
jax: 0.10.0
libtpu: 0.0.40
codegen_flags: <defaults>
</compile_context>

<pallas_src>
import functools
import math

import jax
import jax.numpy as jnp
from jax.experimental import pallas as pl
from jax.experimental.pallas import tpu as pltpu

HIDDEN = 32
LOG_2PI = math.log(2.0 * math.pi)


def _round_up(x, m):
    return ((x + m - 1) // m) * m


def make_actor_kernel(state_dim, action_dim):
    H = HIDDEN

    def kernel(xt_ref, epst_ref, w_ref, b_ref, act_ref, lp_ref):
        # --- parameters (resident in VMEM, fetched once across the whole grid) ---
        w1t = w_ref[0:H, 0:state_dim]                     # [32, S]
        w2t = w_ref[H:2 * H, 0:H]                         # [32, 32]
        wht = w_ref[2 * H:2 * H + 2 * action_dim, 0:H]    # [2A, 32]  (mean | log_std)
        b1 = b_ref[0:H, :]                                # [32, 1]
        b2 = b_ref[H:2 * H, :]                            # [32, 1]
        bh = b_ref[2 * H:2 * H + 2 * action_dim, :]       # [2A, 1]

        # --- MLP trunk, batch on the lane axis ---
        xt = xt_ref[...]                                  # [S, TB]
        h1 = jnp.maximum(
            jnp.dot(w1t, xt, preferred_element_type=jnp.float32) + b1, 0.0)
        h2 = jnp.maximum(
            jnp.dot(w2t, h1, preferred_element_type=jnp.float32) + b2, 0.0)

        # --- fused mean / log_std heads ---
        heads = jnp.dot(wht, h2, preferred_element_type=jnp.float32) + bh  # [2A, TB]
        mean = heads[0:action_dim, :]
        log_std = jnp.clip(heads[action_dim:2 * action_dim, :], -20.0, 2.0)
        std = jnp.exp(log_std)
        inv_std = jnp.exp(-log_std)                       # EUP; avoids VPU divide

        # --- rsample + tanh squash ---
        sample = mean + std * epst_ref[...]
        action = jnp.tanh(sample)

        # Matches the PyTorch module exactly: Normal(mean, std).log_prob evaluated
        # at the *tanh'd* action, then tanh-corrected.
        z = (action - mean) * inv_std
        lp = -0.5 * (z * z) - log_std - 0.5 * LOG_2PI
        lp = lp - jnp.log(1.0 - action * action + 1e-06)

        act_ref[...] = action                             # [A, TB] lane-dense store
        lp_ref[...] = jnp.sum(lp, axis=0, keepdims=True)  # [1, TB] lane-dense store

    return kernel


def pack_params(params, state_dim, action_dim):
    """Pack all weights into one [2H+2A, max(S,H)] slab and biases into [2H+2A, 1]."""
    lw = max(state_dim, HIDDEN)

    def pad_lanes(w_t):
        return jnp.pad(w_t, ((0, 0), (0, lw - w_t.shape[1])))

    w1_t = pad_lanes(params["w1"].T)                                   # [32, LW]
    w2_t = pad_lanes(params["w2"].T)                                   # [32, LW]
    wh_t = pad_lanes(jnp.concatenate([params["wm"].T, params["ws"].T], axis=0))
    w_slab = jnp.concatenate([w1_t, w2_t, wh_t], axis=0)               # [2H+2A, LW]
    b_slab = jnp.concatenate(
        [params["b1"], params["b2"], params["bm"], params["bs"]], axis=1).T  # [2H+2A, 1]
    return w_slab, b_slab


@functools.partial(jax.jit, static_argnames=("block_b",))
def actor_forward(state, eps, params, block_b=1024):
    B, S = state.shape
    A = params["wm"].shape[1]
    H = HIDDEN

    w_slab, b_slab = pack_params(params, S, A)
    R, LW = w_slab.shape

    # Batch tile: lane-dense (multiple of 128); re-derived from a VMEM budget that
    # is comfortable even on v7x's 64 MiB VMEM (tiles here are only tens of KiB).
    block_b = _round_up(block_b, 128)
    b_pad = _round_up(B, 128)
    tb = min(block_b, b_pad)
    b_pad = _round_up(b_pad, tb)
    grid = b_pad // tb

    # Batch-on-lane layout: pad batch, then transpose so batch is the last axis.
    xt = jnp.pad(state, ((0, b_pad - B), (0, 0))).T       # [S, B_pad]
    et = jnp.pad(eps, ((0, b_pad - B), (0, 0))).T         # [A, B_pad]

    kernel = make_actor_kernel(S, A)

    grid_spec = pltpu.PrefetchScalarGridSpec(
        num_scalar_prefetch=0,
        grid=(grid,),
        in_specs=[
            pl.BlockSpec((S, tb), lambda i: (0, i)),      # state^T  (pipelined)
            pl.BlockSpec((A, tb), lambda i: (0, i)),      # eps^T    (pipelined)
            pl.BlockSpec((R, LW), lambda i: (0, 0)),      # weight slab (resident)
            pl.BlockSpec((R, 1), lambda i: (0, 0)),       # bias slab   (resident)
        ],
        out_specs=(
            pl.BlockSpec((A, tb), lambda i: (0, i)),      # action^T
            pl.BlockSpec((1, tb), lambda i: (0, i)),      # log_prob^T
        ),
    )

    cost = pl.CostEstimate(
        flops=2 * b_pad * (S * H + H * H + H * 2 * A),
        transcendentals=4 * b_pad * A,
        bytes_accessed=4 * (b_pad * (S + 2 * A + 1) + R * LW + R),
    )

    action_t, logprob_t = pl.pallas_call(
        kernel,
        out_shape=(
            jax.ShapeDtypeStruct((A, b_pad), jnp.float32),
            jax.ShapeDtypeStruct((1, b_pad), jnp.float32),
        ),
        grid_spec=grid_spec,
        compiler_params=pltpu.CompilerParams(
            dimension_semantics=("parallel",),            # megacore on v7x
            vmem_limit_bytes=32 * 1024 * 1024,
        ),
        cost_estimate=cost,
    )(xt, et, w_slab, b_slab)

    return action_t.T[:B], logprob_t.T[:B]


def init_params(key, state_dim, action_dim):
    """Deterministic init mimicking PyTorch nn.Linear default (U[-1/sqrt(fan_in), +])."""
    def linear(k, fan_in, fan_out):
        kw, kb = jax.random.split(k)
        bound = 1.0 / math.sqrt(fan_in)
        w = jax.random.uniform(kw, (fan_in, fan_out), jnp.float32, -bound, bound)
        b = jax.random.uniform(kb, (1, fan_out), jnp.float32, -bound, bound)
        return w, b

    k1, k2, k3, k4 = jax.random.split(key, 4)
    w1, b1 = linear(k1, state_dim, HIDDEN)
    w2, b2 = linear(k2, HIDDEN, HIDDEN)
    wm, bm = linear(k3, HIDDEN, action_dim)
    ws, bs = linear(k4, HIDDEN, action_dim)
    return {"w1": w1, "b1": b1, "w2": w2, "b2": b2,
            "wm": wm, "bm": bm, "ws": ws, "bs": bs}


def actor_reference(state, eps, p):
    """Pure-JAX reference for correctness check (original [B, F] layout)."""
    h1 = jax.nn.relu(state @ p["w1"] + p["b1"])
    h2 = jax.nn.relu(h1 @ p["w2"] + p["b2"])
    mean = h2 @ p["wm"] + p["bm"]
    log_std = jnp.clip(h2 @ p["ws"] + p["bs"], -20.0, 2.0)
    std = jnp.exp(log_std)
    action = jnp.tanh(mean + std * eps)
    z = (action - mean) / std
    lp = -0.5 * z * z - log_std - 0.5 * LOG_2PI - jnp.log(1.0 - action**2 + 1e-06)
    return action, jnp.sum(lp, axis=1, keepdims=True)


if __name__ == "__main__":
    key = jax.random.PRNGKey(0)
    k_param, k_state, k_eps, k_state2, k_eps2 = jax.random.split(key, 5)

    batch, state_dim, action_dim = 4, 8, 4
    params = init_params(k_param, state_dim, action_dim)

    # Small sanity case (single grid step).
    state = jax.random.normal(k_state, (batch, state_dim), jnp.float32)
    eps = jax.random.normal(k_eps, (batch, action_dim), jnp.float32)
    action, log_prob = actor_forward(state, eps, params)
    jax.block_until_ready((action, log_prob))
    ref_action, ref_lp = actor_reference(state, eps, params)
    assert action.shape == (batch, action_dim) and log_prob.shape == (batch, 1)
    assert jnp.allclose(action, ref_action, atol=1e-5, rtol=1e-5)
    assert jnp.allclose(log_prob, ref_lp, atol=1e-4, rtol=1e-4)

    # Larger, non-multiple-of-tile batch to exercise the pipelined batch grid.
    batch2 = 300
    state2 = jax.random.normal(k_state2, (batch2, state_dim), jnp.float32)
    eps2 = jax.random.normal(k_eps2, (batch2, action_dim), jnp.float32)
    action2, log_prob2 = actor_forward(state2, eps2, params, block_b=128)  # grid = 3
    jax.block_until_ready((action2, log_prob2))
    ref_action2, ref_lp2 = actor_reference(state2, eps2, params)
    assert action2.shape == (batch2, action_dim) and log_prob2.shape == (batch2, 1)
    assert jnp.allclose(action2, ref_action2, atol=1e-5, rtol=1e-5)
    assert jnp.allclose(log_prob2, ref_lp2, atol=2e-4, rtol=1e-4)

    print("KERNEL_OK")
</pallas_src>

<mosaic_0001>
module attributes {stable_mosaic.version = 11 : i64} {
  func.func @kernel(%arg0: i32, %arg1: memref<8x128xf32, #tpu.memory_space<vmem>>, %arg2: memref<4x128xf32, #tpu.memory_space<vmem>>, %arg3: memref<72x32xf32, #tpu.memory_space<vmem>>, %arg4: memref<72x1xf32, #tpu.memory_space<vmem>>, %arg5: memref<4x128xf32, #tpu.memory_space<vmem>>, %arg6: memref<1x128xf32, #tpu.memory_space<vmem>>) attributes {dimension_semantics = [#tpu.dimension_semantics<parallel>], iteration_bounds = array<i64: 1>, scalar_prefetch = 0 : i64, scratch_operands = 0 : i64, tpu.core_type = #tpu.core_type<tc>, window_params = [{transform_indices = @transform_0, window_bounds = array<i64: 8, 128>}, {transform_indices = @transform_1, window_bounds = array<i64: 4, 128>}, {pipeline_mode = #tpu.pipeline_mode<synchronous>, transform_indices = @transform_2, window_bounds = array<i64: 72, 32>}, {pipeline_mode = #tpu.pipeline_mode<synchronous>, transform_indices = @transform_3, window_bounds = array<i64: 72, 1>}, {transform_indices = @transform_4, window_bounds = array<i64: 4, 128>}, {transform_indices = @transform_5, window_bounds = array<i64: 1, 128>}]} {
    %c0 = arith.constant 0 : index
    %c0_0 = arith.constant 0 : index
    %0 = vector.load %arg3[%c0, %c0_0] : memref<72x32xf32, #tpu.memory_space<vmem>>, vector<32x8xf32>
    %c32 = arith.constant 32 : index
    %c0_1 = arith.constant 0 : index
    %1 = vector.load %arg3[%c32, %c0_1] : memref<72x32xf32, #tpu.memory_space<vmem>>, vector<32x32xf32>
    %c64 = arith.constant 64 : index
    %c0_2 = arith.constant 0 : index
    %2 = vector.load %arg3[%c64, %c0_2] : memref<72x32xf32, #tpu.memory_space<vmem>>, vector<8x32xf32>
    %c0_3 = arith.constant 0 : index
    %c0_4 = arith.constant 0 : index
    %3 = vector.load %arg4[%c0_3, %c0_4] : memref<72x1xf32, #tpu.memory_space<vmem>>, vector<32x1xf32>
    %c32_5 = arith.constant 32 : index
    %c0_6 = arith.constant 0 : index
    %4 = vector.load %arg4[%c32_5, %c0_6] : memref<72x1xf32, #tpu.memory_space<vmem>>, vector<32x1xf32>
    %c64_7 = arith.constant 64 : index
    %c0_8 = arith.constant 0 : index
    %5 = vector.load %arg4[%c64_7, %c0_8] : memref<72x1xf32, #tpu.memory_space<vmem>>, vector<8x1xf32>
    %c0_9 = arith.constant 0 : index
    %c0_10 = arith.constant 0 : index
    %6 = vector.load %arg1[%c0_9, %c0_10] : memref<8x128xf32, #tpu.memory_space<vmem>>, vector<8x128xf32>
    %cst = arith.constant dense<0.000000e+00> : vector<32x128xf32>
    %7 = tpu.matmul %0, %6, %cst {dimension_numbers = #tpu.dot_dimension_numbers<[1], [0], [0], [1], [0, 0, 1, 1], [], []>} : vector<32x8xf32>, vector<8x128xf32>, vector<32x128xf32> -> vector<32x128xf32>
    %8 = vector.broadcast %3 : vector<32x1xf32> to vector<32x128xf32>
    %9 = arith.addf %7, %8 : vector<32x128xf32>
    %cst_11 = arith.constant 0.000000e+00 : f32
    %10 = vector.broadcast %cst_11 : f32 to vector<32x128xf32>
    %11 = arith.maximumf %9, %10 : vector<32x128xf32>
    %cst_12 = arith.constant dense<0.000000e+00> : vector<32x128xf32>
    %12 = tpu.matmul %1, %11, %cst_12 {dimension_numbers = #tpu.dot_dimension_numbers<[1], [0], [0], [1], [0, 0, 1, 1], [], []>} : vector<32x32xf32>, vector<32x128xf32>, vector<32x128xf32> -> vector<32x128xf32>
    %13 = vector.broadcast %4 : vector<32x1xf32> to vector<32x128xf32>
    %14 = arith.addf %12, %13 : vector<32x128xf32>
    %cst_13 = arith.constant 0.000000e+00 : f32
    %15 = vector.broadcast %cst_13 : f32 to vector<32x128xf32>
    %16 = arith.maximumf %14, %15 : vector<32x128xf32>
    %cst_14 = arith.constant dense<0.000000e+00> : vector<8x128xf32>
    %17 = tpu.matmul %2, %16, %cst_14 {dimension_numbers = #tpu.dot_dimension_numbers<[1], [0], [0], [1], [0, 0, 1, 1], [], []>} : vector<8x32xf32>, vector<32x128xf32>, vector<8x128xf32> -> vector<8x128xf32>
    %18 = vector.broadcast %5 : vector<8x1xf32> to vector<8x128xf32>
    %19 = arith.addf %17, %18 : vector<8x128xf32>
    %20 = vector.extract_strided_slice %19 {offsets = [0, 0], sizes = [4, 128], strides = [1, 1]} : vector<8x128xf32> to vector<4x128xf32>
    %21 = vector.extract_strided_slice %19 {offsets = [4, 0], sizes = [4, 128], strides = [1, 1]} : vector<8x128xf32> to vector<4x128xf32>
    %cst_15 = arith.constant -2.000000e+01 : f32
    %cst_16 = arith.constant 2.000000e+00 : f32
    %22 = vector.broadcast %cst_15 : f32 to vector<4x128xf32>
    %23 = arith.maximumf %22, %21 : vector<4x128xf32>
    %24 = vector.broadcast %cst_16 : f32 to vector<4x128xf32>
    %25 = arith.minimumf %24, %23 : vector<4x128xf32>
    %26 = math.exp %25 : vector<4x128xf32>
    %cst_17 = arith.constant 0.000000e+00 : f32
    %27 = vector.broadcast %cst_17 : f32 to vector<4x128xf32>
    %28 = arith.subf %27, %25 : vector<4x128xf32>
    %29 = math.exp %28 : vector<4x128xf32>
    %c0_18 = arith.constant 0 : index
    %c0_19 = arith.constant 0 : index
    %30 = vector.load %arg2[%c0_18, %c0_19] : memref<4x128xf32, #tpu.memory_space<vmem>>, vector<4x128xf32>
    %31 = arith.mulf %26, %30 : vector<4x128xf32>
    %32 = arith.addf %20, %31 : vector<4x128xf32>
    %33 = math.tanh %32 : vector<4x128xf32>
    %34 = arith.subf %33, %20 : vector<4x128xf32>
    %35 = arith.mulf %34, %29 : vector<4x128xf32>
    %36 = arith.mulf %35, %35 : vector<4x128xf32>
    %cst_20 = arith.constant -5.000000e-01 : f32
    %37 = vector.broadcast %cst_20 : f32 to vector<4x128xf32>
    %38 = arith.mulf %37, %36 : vector<4x128xf32>
    %39 = arith.subf %38, %25 : vector<4x128xf32>
    %cst_21 = arith.constant 0.918938517 : f32
    %40 = vector.broadcast %cst_21 : f32 to vector<4x128xf32>
    %41 = arith.subf %39, %40 : vector<4x128xf32>
    %42 = arith.mulf %33, %33 : vector<4x128xf32>
    %cst_22 = arith.constant 1.000000e+00 : f32
    %43 = vector.broadcast %cst_22 : f32 to vector<4x128xf32>
    %44 = arith.subf %43, %42 : vector<4x128xf32>
    %cst_23 = arith.constant 9.99999997E-7 : f32
    %45 = vector.broadcast %cst_23 : f32 to vector<4x128xf32>
    %46 = arith.addf %44, %45 : vector<4x128xf32>
    %47 = math.log %46 : vector<4x128xf32>
    %48 = arith.subf %41, %47 : vector<4x128xf32>
    %c0_24 = arith.constant 0 : index
    %c0_25 = arith.constant 0 : index
    %49 = vector.load %arg5[%c0_24, %c0_25] : memref<4x128xf32, #tpu.memory_space<vmem>>, vector<4x128xf32>
    tpu.vector_store %arg5[%c0_24, %c0_25], %33 {strides = array<i32>} : memref<4x128xf32, #tpu.memory_space<vmem>>, vector<4x128xf32>,
    %cst_26 = arith.constant dense<0.000000e+00> : vector<128xf32>
    %50 = vector.multi_reduction <add>, %48, %cst_26 [0] : vector<4x128xf32> to vector<128xf32>
    %51 = vector.shape_cast %50 : vector<128xf32> to vector<1x128xf32>
    %c0_27 = arith.constant 0 : index
    %c0_28 = arith.constant 0 : index
    %52 = vector.load %arg6[%c0_27, %c0_28] : memref<1x128xf32, #tpu.memory_space<vmem>>, vector<1x128xf32>
    tpu.vector_store %arg6[%c0_27, %c0_28], %51 {strides = array<i32>} : memref<1x128xf32, #tpu.memory_space<vmem>>, vector<1x128xf32>,
    return
  }
  func.func @transform_0(%arg0: i32) -> (i32, i32) {
    %c0_i32 = arith.constant 0 : i32
    %c0_i32_0 = arith.constant 0 : i32
    return %c0_i32, %arg0 : i32, i32
  }
  func.func @transform_1(%arg0: i32) -> (i32, i32) {
    %c0_i32 = arith.constant 0 : i32
    %c0_i32_0 = arith.constant 0 : i32
    return %c0_i32, %arg0 : i32, i32
  }
  func.func @transform_2(%arg0: i32) -> (i32, i32) {
    %c0_i32 = arith.constant 0 : i32
    %c0_i32_0 = arith.constant 0 : i32
    %c0_i32_1 = arith.constant 0 : i32
    return %c0_i32, %c0_i32_0 : i32, i32
  }
  func.func @transform_3(%arg0: i32) -> (i32, i32) {
    %c0_i32 = arith.constant 0 : i32
    %c0_i32_0 = arith.constant 0 : i32
    %c0_i32_1 = arith.constant 0 : i32
    return %c0_i32, %c0_i32_0 : i32, i32
  }
  func.func @transform_4(%arg0: i32) -> (i32, i32) {
    %c0_i32 = arith.constant 0 : i32
    %c0_i32_0 = arith.constant 0 : i32
    return %c0_i32, %arg0 : i32, i32
  }
  func.func @transform_5(%arg0: i32) -> (i32, i32) {
    %c0_i32 = arith.constant 0 : i32
    %c0_i32_0 = arith.constant 0 : i32
    return %c0_i32, %arg0 : i32, i32
  }
}

</mosaic_0001>

<llo_original>
// kernel: actor_forward.1
$region0: #{actor_forward.1}
  #allocation0 [shape = 'u32[]', space=smem, size = 0x4, offset = 0x4, fixed_abs, tag = 'smem constant byte address 0x4 - core index']
  #allocation1 [shape = 'u32[144,128]{1,0:T(1,128)}', space=vmem, size = 0x12000, scoped, tag = 'internal scratch']
  %s0 = inlined_call_operand.vmem [shape: f32[8,128], index: 0, kind: input, shape index: {}]
  %s1 = inlined_call_operand.vmem [shape: f32[4,128], index: 1, kind: input, shape index: {}]
  %s2 = inlined_call_operand.vmem [shape: f32[72,32], index: 2, kind: input, shape index: {}]
  %s3 = inlined_call_operand.vmem [shape: f32[72,1], index: 3, kind: input, shape index: {}]
  %s4 = inlined_call_operand.vmem [shape: f32[4,128], index: 4, kind: output, shape index: {0}]
  %s5 = inlined_call_operand.vmem [shape: f32[1,128], index: 5, kind: output, shape index: {1}]
  %6 = xla_tuple %s4, %s5
  %s7 = sld [smem:[#allocation0]]
  $region34: #{actor_forward.1} parent=0
    _
  %s9 = ssub.s32 1, %s7
  %s10 = scalar_select 0, %s9, %s7
  // Predicated region
  $region2: #{actor_forward.1} parent=0 // pred_check
    _
  $region3: #{actor_forward.1} parent=0 // pred_check_branch
    %12 = sbr.rel (0) target = $region5
  $region4: #{actor_forward.1} parent=0 // pred_region
    _
  $region5: #{actor_forward.1} parent=0 // pred_fallthru
    _
  // Predicated region
  $region6: #{actor_forward.1} parent=0 // pred_check
    _
  $region7: #{actor_forward.1} parent=0 // pred_check_branch
    %14 = sbr.rel (0) target = $region9
  $region8: #{actor_forward.1} parent=0 // pred_region
    _
  $region9: #{actor_forward.1} parent=0 // pred_fallthru
    _
  // Predicated region
  $region10: #{actor_forward.1} parent=0 // pred_check
    _
  $region11: #{actor_forward.1} parent=0 // pred_check_branch
    %16 = sbr.rel (0) target = $region13
  $region12: #{actor_forward.1} parent=0 // pred_region
    _
  $region13: #{actor_forward.1} parent=0 // pred_fallthru
    _
  // Predicated region
  $region14: #{actor_forward.1} parent=0 // pred_check
    _
  $region15: #{actor_forward.1} parent=0 // pred_check_branch
    %18 = sbr.rel (0) target = $region17
  $region16: #{actor_forward.1} parent=0 // pred_region
    _
  $region17: #{actor_forward.1} parent=0 // pred_fallthru
    _
  %v19 = vld [vmem:[%s2] sm:$0xff]
  %v20 = vld [vmem:[%s2 + $0x8] sm:$0xff]
  %v21 = vld [vmem:[%s2 + $0x10] sm:$0xff]
  %v22 = vld [vmem:[%s2 + $0x18] sm:$0xff]
  %v23 = vld [vmem:[%s2 + $0x20] sm:$0xff]
  %v24 = vld [vmem:[%s2 + $0x28] sm:$0xff]
  %v25 = vld [vmem:[%s2 + $0x30] sm:$0xff]
  %v26 = vld [vmem:[%s2 + $0x38] sm:$0xff]
  %v27 = vld [vmem:[%s2 + $0x40] sm:$0xff]
  %v28 = vld [vmem:[%s3] sm:$0xff]
  %v29 = vld [vmem:[%s3 + $0x8] sm:$0xff]
  %v30 = vld [vmem:[%s3 + $0x10] sm:$0xff]
  %v31 = vld [vmem:[%s3 + $0x18] sm:$0xff]
  %v32 = vld [vmem:[%s3 + $0x20] sm:$0xff]
  %v33 = vld [vmem:[%s3 + $0x28] sm:$0xff]
  %v34 = vld [vmem:[%s3 + $0x30] sm:$0xff]
  %v35 = vld [vmem:[%s3 + $0x38] sm:$0xff]
  %v36 = vld [vmem:[%s3 + $0x40] sm:$0xff]
  %v37 = vld [vmem:[%s0] sm:$0xff]
  %39 = vset.pattern.permute.xlu0 0
  %40 = vperm.xlu0 %39, %v28
  %v41 = vpop.permute.xlu0 %40
  %44 = vset.pattern.permute.xlu0 0
  %45 = vperm.xlu0 %44, %v29
  %v46 = vpop.permute.xlu0 %45
  %49 = vset.pattern.permute.xlu0 0
  %50 = vperm.xlu0 %49, %v30
  %v51 = vpop.permute.xlu0 %50
  %54 = vset.pattern.permute.xlu0 0
  %55 = vperm.xlu0 %54, %v31
  %v56 = vpop.permute.xlu0 %55
  %vm58 = vcmask 64512
  %v60 = vsel %vm58, %v19, 0
  %v63 = vsel %vm58, %v20, 0
  %v66 = vsel %vm58, %v21, 0
  %v69 = vsel %vm58, %v22, 0
  %71 = vmatprep.subr.mxu0 0.0
  %72 = vmatpush1.msra.mxu0 %v37
  %73 = vmatprep.subr.mxu0 0.0
  %74 = vmatpush1.msra.mxu0 0.0
  %75 = vmatprep.subr.mxu0 0.0
  %76 = vmatpush1.msra.mxu0 0.0
  %77 = vmatprep.subr.mxu0 0.0
  %78 = vmatpush1.msra.mxu0 0.0
  %79 = vmatprep.subr.mxu0 0.0
  %80 = vmatpush1.msra.mxu0 0.0
  %81 = vmatprep.subr.mxu0 0.0
  %82 = vmatpush1.msra.mxu0 0.0
  %83 = vmatprep.subr.mxu0 0.0
  %84 = vmatpush1.msra.mxu0 0.0
  %85 = vmatprep.subr.mxu0 0.0
  %86 = vmatpush1.msra.mxu0 0.0
  %87 = vmatprep.subr.mxu0 0.0
  %88 = vmatpush1.msra.mxu0 0.0
  %89 = vmatprep.subr.mxu0 0.0
  %90 = vmatpush1.msra.mxu0 0.0
  %91 = vmatprep.subr.mxu0 0.0
  %92 = vmatpush1.msra.mxu0 0.0
  %93 = vmatprep.subr.mxu0 0.0
  %94 = vmatpush1.msra.mxu0 0.0
  %95 = vmatprep.subr.mxu0 0.0
  %96 = vmatpush1.msra.mxu0 0.0
  %97 = vmatprep.subr.mxu0 0.0
  %98 = vmatpush1.msra.mxu0 0.0
  %99 = vmatprep.subr.mxu0 0.0
  %100 = vmatpush1.msra.mxu0 0.0
  %101 = vmatprep.subr.mxu0 0.0
  %102 = vmatpush1.msra.mxu0 0.0
  %103 = vmatprep.subr.mxu0 0.0
  %104 = vmatpush1.msra.mxu0 0.0
  %105 = vmatprep.subr.mxu0 0.0
  %106 = vmatpush1.msra.mxu0 0.0
  %107 = vmatprep.subr.mxu0 0.0
  %108 = vmatpush1.msra.mxu0 0.0
  %109 = vmatprep.subr.mxu0 0.0
  %110 = vmatpush1.msra.mxu0 0.0
  %111 = vmatprep.subr.mxu0 0.0
  %112 = vmatpush1.msra.mxu0 0.0
  %113 = vmatprep.subr.mxu0 0.0
  %114 = vmatpush1.msra.mxu0 0.0
  %115 = vmatprep.subr.mxu0 0.0
  %116 = vmatpush1.msra.mxu0 0.0
  %117 = vmatprep.subr.mxu0 0.0
  %118 = vmatpush1.msra.mxu0 0.0
  %119 = vmatprep.subr.mxu0 0.0
  %120 = vmatpush1.msra.mxu0 0.0
  %121 = vmatprep.subr.mxu0 0.0
  %122 = vmatpush1.msra.mxu0 0.0
  %123 = vmatprep.subr.mxu0 0.0
  %124 = vmatpush1.msra.mxu0 0.0
  %125 = vmatprep.subr.mxu0 0.0
  %126 = vmatpush1.msra.mxu0 0.0
  %127 = vmatprep.subr.mxu0 0.0
  %128 = vmatpush1.msra.mxu0 0.0
  %129 = vmatprep.subr.mxu0 0.0
  %130 = vmatpush1.msra.mxu0 0.0
  %131 = vmatprep.subr.mxu0 0.0
  %132 = vmatpush1.msra.mxu0 0.0
  %133 = vmatprep.subr.mxu0 0.0
  %134 = vmatpush1.msra.mxu0 0.0
  %135 = vmatprep.mubr.f32.mxu0 0.0
  %136 = vmatmul.mubr.f32.gmra.mrb[0].mxu0 %v60
  %v137 = vpop.f32.mrb[0].mxu0
  %v138 = vadd.f32 %v41, %v137
  %v139 = vpop.f32.mrb[0].mxu0
  %140 = vmatprep.mubr.f32.mxu0 0.0
  %141 = vmatmul.mubr.f32.gmra.mrb[0].mxu0 %v63
  %v142 = vpop.f32.mrb[0].mxu0
  %v143 = vadd.f32 %v46, %v142
  %v144 = vpop.f32.mrb[0].mxu0
  %145 = vmatprep.mubr.f32.mxu0 0.0
  %146 = vmatmul.mubr.f32.gmra.mrb[0].mxu0 %v66
  %v147 = vpop.f32.mrb[0].mxu0
  %v148 = vadd.f32 %v51, %v147
  %v149 = vpop.f32.mrb[0].mxu0
  %150 = vmatprep.mubr.f32.mxu0 0.0
  %151 = vmatmul.mubr.f32.gmra.mrb[0].mxu0 %v69
  %v152 = vpop.f32.mrb[0].mxu0
  %v153 = vadd.f32 %v56, %v152
  %v154 = vpop.f32.mrb[0].mxu0
  %155 = vdwg.mxu0
  %v156 = vmax.f32 %v138, 0.0
  %v157 = vmax.f32 %v143, 0.0
  %v158 = vmax.f32 %v148, 0.0
  %v159 = vmax.f32 %v153, 0.0
  %161 = vset.pattern.permute.xlu0 0
  %162 = vperm.xlu0 %161, %v32
  %v163 = vpop.permute.xlu0 %162
  %166 = vset.pattern.permute.xlu0 0
  %167 = vperm.xlu0 %166, %v33
  %v168 = vpop.permute.xlu0 %167
  %171 = vset.pattern.permute.xlu0 0
  %172 = vperm.xlu0 %171, %v34
  %v173 = vpop.permute.xlu0 %172
  %176 = vset.pattern.permute.xlu0 0
  %177 = vperm.xlu0 %176, %v35
  %v178 = vpop.permute.xlu0 %177
  %vm180 = vcmask 261120
  %v182 = vsel %vm180, %v23, 0
  %v185 = vsel %vm180, %v24, 0
  %v188 = vsel %vm180, %v25, 0
  %v191 = vsel %vm180, %v26, 0
  %193 = vmatprep.subr.mxu0 0.0
  %194 = vmatpush1.msra.mxu0 %v156
  %195 = vmatprep.subr.mxu0 0.0
  %196 = vmatpush1.msra.mxu0 %v157
  %197 = vmatprep.subr.mxu0 0.0
  %198 = vmatpush1.msra.mxu0 %v158
  %199 = vmatprep.subr.mxu0 0.0
  %200 = vmatpush1.msra.mxu0 %v159
  %201 = vmatprep.subr.mxu0 0.0
  %202 = vmatpush1.msra.mxu0 0.0
  %203 = vmatprep.subr.mxu0 0.0
  %204 = vmatpush1.msra.mxu0 0.0
  %205 = vmatprep.subr.mxu0 0.0
  %206 = vmatpush1.msra.mxu0 0.0
  %207 = vmatprep.subr.mxu0 0.0
  %208 = vmatpush1.msra.mxu0 0.0
  %209 = vmatprep.subr.mxu0 0.0
  %210 = vmatpush1.msra.mxu0 0.0
  %211 = vmatprep.subr.mxu0 0.0
  %212 = vmatpush1.msra.mxu0 0.0
  %213 = vmatprep.subr.mxu0 0.0
  %214 = vmatpush1.msra.mxu0 0.0
  %215 = vmatprep.subr.mxu0 0.0
  %216 = vmatpush1.msra.mxu0 0.0
  %217 = vmatprep.subr.mxu0 0.0
  %218 = vmatpush1.msra.mxu0 0.0
  %219 = vmatprep.subr.mxu0 0.0
  %220 = vmatpush1.msra.mxu0 0.0
  %221 = vmatprep.subr.mxu0 0.0
  %222 = vmatpush1.msra.mxu0 0.0
  %223 = vmatprep.subr.mxu0 0.0
  %224 = vmatpush1.msra.mxu0 0.0
  %225 = vmatprep.subr.mxu0 0.0
  %226 = vmatpush1.msra.mxu0 0.0
  %227 = vmatprep.subr.mxu0 0.0
  %228 = vmatpush1.msra.mxu0 0.0
  %229 = vmatprep.subr.mxu0 0.0
  %230 = vmatpush1.msra.mxu0 0.0
  %231 = vmatprep.subr.mxu0 0.0
  %232 = vmatpush1.msra.mxu0 0.0
  %233 = vmatprep.subr.mxu0 0.0
  %234 = vmatpush1.msra.mxu0 0.0
  %235 = vmatprep.subr.mxu0 0.0
  %236 = vmatpush1.msra.mxu0 0.0
  %237 = vmatprep.subr.mxu0 0.0
  %238 = vmatpush1.msra.mxu0 0.0
  %239 = vmatprep.subr.mxu0 0.0
  %240 = vmatpush1.msra.mxu0 0.0
  %241 = vmatprep.subr.mxu0 0.0
  %242 = vmatpush1.msra.mxu0 0.0
  %243 = vmatprep.subr.mxu0 0.0
  %244 = vmatpush1.msra.mxu0 0.0
  %245 = vmatprep.subr.mxu0 0.0
  %246 = vmatpush1.msra.mxu0 0.0
  %247 = vmatprep.subr.mxu0 0.0
  %248 = vmatpush1.msra.mxu0 0.0
  %249 = vmatprep.subr.mxu0 0.0
  %250 = vmatpush1.msra.mxu0 0.0
  %251 = vmatprep.subr.mxu0 0.0
  %252 = vmatpush1.msra.mxu0 0.0
  %253 = vmatprep.subr.mxu0 0.0
  %254 = vmatpush1.msra.mxu0 0.0
  %255 = vmatprep.subr.mxu0 0.0
  %256 = vmatpush1.msra.mxu0 0.0
  %257 = vmatprep.mubr.f32.mxu0 0.0
  %258 = vmatmul.mubr.f32.gmra.mrb[0].mxu0 %v182
  %v259 = vpop.f32.mrb[0].mxu0
  %v260 = vadd.f32 %v163, %v259
  %v261 = vpop.f32.mrb[0].mxu0
  %262 = vmatprep.mubr.f32.mxu0 0.0
  %263 = vmatmul.mubr.f32.gmra.mrb[0].mxu0 %v185
  %v264 = vpop.f32.mrb[0].mxu0
  %v265 = vadd.f32 %v168, %v264
  %v266 = vpop.f32.mrb[0].mxu0
  %267 = vmatprep.mubr.f32.mxu0 0.0
  %268 = vmatmul.mubr.f32.gmra.mrb[0].mxu0 %v188
  %v269 = vpop.f32.mrb[0].mxu0
  %v270 = vadd.f32 %v173, %v269
  %v271 = vpop.f32.mrb[0].mxu0
  %272 = vmatprep.mubr.f32.mxu0 0.0
  %273 = vmatmul.mubr.f32.gmra.mrb[0].mxu0 %v191
  %v274 = vpop.f32.mrb[0].mxu0
  %v275 = vadd.f32 %v178, %v274
  %v276 = vpop.f32.mrb[0].mxu0
  %277 = vdwg.mxu0
  %v278 = vmax.f32 %v260, 0.0
  %v279 = vmax.f32 %v265, 0.0
  %v280 = vmax.f32 %v270, 0.0
  %v281 = vmax.f32 %v275, 0.0
  %283 = vset.pattern.permute.xlu0 0
  %284 = vperm.xlu0 %283, %v36
  %v285 = vpop.permute.xlu0 %284
  %v288 = vsel %vm180, %v27, 0
  %290 = vmatprep.subr.mxu0 0.0
  %291 = vmatpush1.msra.mxu0 %v278
  %292 = vmatprep.subr.mxu0 0.0
  %293 = vmatpush1.msra.mxu0 %v279
  %294 = vmatprep.subr.mxu0 0.0
  %295 = vmatpush1.msra.mxu0 %v280
  %296 = vmatprep.subr.mxu0 0.0
  %297 = vmatpush1.msra.mxu0 %v281
  %298 = vmatprep.subr.mxu0 0.0
  %299 = vmatpush1.msra.mxu0 0.0
  %300 = vmatprep.subr.mxu0 0.0
  %301 = vmatpush1.msra.mxu0 0.0
  %302 = vmatprep.subr.mxu0 0.0
  %303 = vmatpush1.msra.mxu0 0.0
  %304 = vmatprep.subr.mxu0 0.0
  %305 = vmatpush1.msra.mxu0 0.0
  %306 = vmatprep.subr.mxu0 0.0
  %307 = vmatpush1.msra.mxu0 0.0
  %308 = vmatprep.subr.mxu0 0.0
  %309 = vmatpush1.msra.mxu0 0.0
  %310 = vmatprep.subr.mxu0 0.0
  %311 = vmatpush1.msra.mxu0 0.0
  %312 = vmatprep.subr.mxu0 0.0
  %313 = vmatpush1.msra.mxu0 0.0
  %314 = vmatprep.subr.mxu0 0.0
  %315 = vmatpush1.msra.mxu0 0.0
  %316 = vmatprep.subr.mxu0 0.0
  %317 = vmatpush1.msra.mxu0 0.0
  %318 = vmatprep.subr.mxu0 0.0
  %319 = vmatpush1.msra.mxu0 0.0
  %320 = vmatprep.subr.mxu0 0.0
  %321 = vmatpush1.msra.mxu0 0.0
  %322 = vmatprep.subr.mxu0 0.0
  %323 = vmatpush1.msra.mxu0 0.0
  %324 = vmatprep.subr.mxu0 0.0
  %325 = vmatpush1.msra.mxu0 0.0
  %326 = vmatprep.subr.mxu0 0.0
  %327 = vmatpush1.msra.mxu0 0.0
  %328 = vmatprep.subr.mxu0 0.0
  %329 = vmatpush1.msra.mxu0 0.0
  %330 = vmatprep.subr.mxu0 0.0
  %331 = vmatpush1.msra.mxu0 0.0
  %332 = vmatprep.subr.mxu0 0.0
  %333 = vmatpush1.msra.mxu0 0.0
  %334 = vmatprep.subr.mxu0 0.0
  %335 = vmatpush1.msra.mxu0 0.0
  %336 = vmatprep.subr.mxu0 0.0
  %337 = vmatpush1.msra.mxu0 0.0
  %338 = vmatprep.subr.mxu0 0.0
  %339 = vmatpush1.msra.mxu0 0.0
  %340 = vmatprep.subr.mxu0 0.0
  %341 = vmatpush1.msra.mxu0 0.0
  %342 = vmatprep.subr.mxu0 0.0
  %343 = vmatpush1.msra.mxu0 0.0
  %344 = vmatprep.subr.mxu0 0.0
  %345 = vmatpush1.msra.mxu0 0.0
  %346 = vmatprep.subr.mxu0 0.0
  %347 = vmatpush1.msra.mxu0 0.0
  %348 = vmatprep.subr.mxu0 0.0
  %349 = vmatpush1.msra.mxu0 0.0
  %350 = vmatprep.subr.mxu0 0.0
  %351 = vmatpush1.msra.mxu0 0.0
  %352 = vmatprep.subr.mxu0 0.0
  %353 = vmatpush1.msra.mxu0 0.0
  %354 = vmatprep.mubr.f32.mxu0 0.0
  %355 = vmatmul.mubr.f32.gmra.mrb[0].mxu0 %v288
  %v356 = vpop.f32.mrb[0].mxu0
  %v357 = vadd.f32 %v285, %v356
  %v358 = vpop.f32.mrb[0].mxu0
  %359 = vdwg.mxu0
  %v360 = vmax.f32 %v357, -20.0
  %v361 = vmin.f32 %v360, 2.0
  %v362 = vmul.f32 %v361, 1.442695
  %v363 = vpow.pop %v362
  %v364 = vsub.f32 0.0, %v361
  %v365 = vmul.f32 %v364, 1.442695
  %v366 = vpow.pop %v365
  %v367 = vld [vmem:[%s1] sm:$0xf]
  %v369 = vrot.slane %v367, 4
  %v371 = vmul.f32 %v363, %v369
  %v373 = vrot.slane %v371, 4
  %v375 = vadd.f32 %v357, %v373
  %v376 = vtanh.pop %v375
  %v377 = vsub.f32 %v376, %v357
  %v379 = vrot.slane %v366, 4
  %v381 = vmul.f32 %v377, %v379
  %v382 = vmul.f32 %v381, %v381
  %v383 = vmul.f32 %v382, -0.5
  %v385 = vrot.slane %v361, 4
  %v387 = vsub.f32 %v383, %v385
  %v388 = vsub.f32 %v387, 0.9189385
  %v389 = vmul.f32 %v376, %v376
  %v390 = vsub.f32 1.0, %v389
  %v391 = vadd.f32 %v390, 1e-06
  %v392 = vlog2.pop %v391
  %v393 = vmul.f32 %v392, 0.6931472
  %v394 = vsub.f32 %v388, %v393
  %395 = vst [vmem:[%s4] sm:$0xf] %v376
  %vm396 = vcmask 1043456
  %v397 = vsel %vm396, %v394, 0.0
  %v398 = vrot.slane %v397, 4
  %v399 = vadd.f32 %v397, %v398
  %v400 = vrot.slane %v399, 2
  %v401 = vadd.f32 %v399, %v400
  %v402 = vrot.slane %v401, 1
  %v403 = vadd.f32 %v401, %v402
  %404 = vst [vmem:[%s5] sm:$0x1] %v403
  // Predicated region
  $region18: #{actor_forward.1} parent=0 // pred_check
    _
  $region19: #{actor_forward.1} parent=0 // pred_check_branch
    %406 = sbr.rel (0) target = $region21
  $region20: #{actor_forward.1} parent=0 // pred_region
    _
  $region21: #{actor_forward.1} parent=0 // pred_fallthru
    _
  // Predicated region
  $region22: #{actor_forward.1} parent=0 // pred_check
    _
  $region23: #{actor_forward.1} parent=0 // pred_check_branch
    %408 = sbr.rel (0) target = $region25
  $region24: #{actor_forward.1} parent=0 // pred_region
    _
  $region25: #{actor_forward.1} parent=0 // pred_fallthru
    _
  // Predicated region
  $region26: #{actor_forward.1} parent=0 // pred_check
    _
  $region27: #{actor_forward.1} parent=0 // pred_check_branch
    %410 = sbr.rel (0) target = $region29
  $region28: #{actor_forward.1} parent=0 // pred_region
    _
  $region29: #{actor_forward.1} parent=0 // pred_fallthru
    _
  // Predicated region
  $region30: #{actor_forward.1} parent=0 // pred_check
    _
  $region31: #{actor_forward.1} parent=0 // pred_check_branch
    %412 = sbr.rel (0) target = $region33
  $region32: #{actor_forward.1} parent=0 // pred_region
    _
  $region33: #{actor_forward.1} parent=0 // pred_fallthru
    _

</llo_original>
